<compile_context>
chip_gen: v7x
topology: tpu7x:2x2x1
jax: 0.10.0
libtpu: 0.0.40
codegen_flags: <defaults>
</compile_context>

<pallas_src>
import functools

import jax
import jax.numpy as jnp
from jax.experimental import pallas as pl
from jax.experimental.pallas import tpu as pltpu


def _round_up(x, m):
    return (x + m - 1) // m * m


def _physical_vmem_bytes():
    """Best-effort per-core VMEM capacity (falls back to the v7x 64 MiB floor)."""
    try:
        info = pltpu.get_tpu_info()
        v = getattr(info, "vmem_capacity_bytes", None)
        if v:
            return int(v)
    except Exception:
        pass
    return 64 * 1024 * 1024


# --------------------------------- kernel ------------------------------------
def _ffn_kernel(x_ref, w1_ref, b1_ref, w2_ref, b2_ref, o_ref, *, approximate_gelu):
    # x_ref: (TM, D); w1_ref: (D, H) bf16; b1_ref: (1, H) f32;
    # w2_ref: (H, D) bf16; b2_ref: (1, D) f32; o_ref: (TM, D) out dtype.
    x = x_ref[...].astype(jnp.bfloat16)                          # bf16 MXU operand
    h = jnp.dot(x, w1_ref[...], preferred_element_type=jnp.float32)
    h = h + b1_ref[...]                                          # f32 bias add (VPU)
    if approximate_gelu:
        # tanh-form GELU: tanh runs on the EUP (its own VLIW slot), so it is nearly free
        # next to the MXU work; erf would be a long VALU polynomial on the critical path.
        c = jnp.float32(0.7978845608028654)                      # sqrt(2/pi)
        h = 0.5 * h * (1.0 + jnp.tanh(c * (h + jnp.float32(0.044715) * h * h * h)))
    else:
        # exact erf form (matches torch.nn.GELU() default in f32)
        h = 0.5 * h * (1.0 + jax.lax.erf(h * jnp.float32(0.7071067811865476)))
    y = jnp.dot(h.astype(jnp.bfloat16), w2_ref[...],
                preferred_element_type=jnp.float32)
    y = y + b2_ref[...]
    o_ref[...] = y.astype(o_ref.dtype)
    # Dropout(p=0.0) after GELU and after Linear2 is the identity (eval semantics).


# --------------------------------- wrapper -----------------------------------
def make_feedforward(w1, b1, w2, b2, *, block_rows=512, out_dtype=jnp.bfloat16,
                     approximate_gelu=True):
    """Prepare FFN parameters ONCE and return apply(x) for x of shape (..., D).

    w1: (D, H), b1: (H,), w2: (H, D), b2: (D,).
    """
    D, H = w1.shape
    assert w2.shape == (H, D) and b1.shape == (H,) and b2.shape == (D,)

    # Parameter prep hoisted out of the per-call path (cast/reshape paid once here).
    w1b = jnp.asarray(w1, jnp.bfloat16)
    w2b = jnp.asarray(w2, jnp.bfloat16)
    b1f = jnp.asarray(b1, jnp.float32).reshape(1, H)
    b2f = jnp.asarray(b2, jnp.float32).reshape(1, D)

    weight_bytes = 2 * D * H * 2 + (H + D) * 4                   # bf16 weights + f32 biases
    out_itemsize = jnp.dtype(out_dtype).itemsize
    kernel = functools.partial(_ffn_kernel, approximate_gelu=approximate_gelu)

    # Generation-aware scoped-VMEM budget (64 MiB/TC on v7x, 128 MiB on v5e/v6e).
    scoped_budget = max(32 * 1024 * 1024, _physical_vmem_bytes() - 16 * 1024 * 1024)

    def apply(x):
        assert x.shape[-1] == D
        lead = x.shape[:-1]
        M = 1
        for s in lead:
            M *= s
        x2 = x.reshape(M, D)            # fold batch/sequence into the row axis (free reshape)
        x_itemsize = jnp.dtype(x2.dtype).itemsize

        # --- row-tile selection: as large as VMEM allows, minimal padding waste ---
        def tile_bytes(tm):
            return (2 * tm * D * x_itemsize        # double-buffered x tiles
                    + 2 * tm * D * out_itemsize    # double-buffered out tiles
                    + tm * H * (4 + 2)             # f32 hidden + bf16 re-cast copy
                    + tm * D * 4)                  # f32 pre-cast output
        tm = max(8, (min(block_rows, _round_up(M, 8)) // 8) * 8)
        while tm > 8 and 2 * weight_bytes + tile_bytes(tm) > int(0.75 * scoped_budget):
            tm = max(8, ((tm // 2) // 8) * 8)
        # Balance tiles so the last (masked) tile isn't mostly zero rows (e.g. M=300 -> 304).
        tm = min(tm, _round_up(pl.cdiv(M, pl.cdiv(M, tm)), 8))
        grid = (pl.cdiv(M, tm),)

        vmem_limit = int(min(scoped_budget,
                             max(32 * 1024 * 1024,
                                 2 * weight_bytes + tile_bytes(tm) + (8 << 20))))

        cost = pl.CostEstimate(
            flops=4 * M * D * H,                               # two matmuls
            transcendentals=M * H,                             # one tanh per hidden element
            bytes_accessed=M * D * x_itemsize + weight_bytes + M * D * out_itemsize,
        )

        def build(single_buffer_weights):
            wkw = dict(pipeline_mode=pl.Buffered(1)) if single_buffer_weights else {}
            in_specs = [
                pl.BlockSpec((tm, D), lambda i: (i, 0)),         # x rows, streamed per tile
                pl.BlockSpec((D, H), lambda i: (0, 0), **wkw),   # w1, grid-invariant
                pl.BlockSpec((1, H), lambda i: (0, 0), **wkw),   # b1
                pl.BlockSpec((H, D), lambda i: (0, 0), **wkw),   # w2
                pl.BlockSpec((1, D), lambda i: (0, 0), **wkw),   # b2
            ]
            return pl.pallas_call(
                kernel,
                out_shape=jax.ShapeDtypeStruct((M, D), out_dtype),
                grid=grid,
                in_specs=in_specs,
                out_specs=pl.BlockSpec((tm, D), lambda i: (i, 0)),
                compiler_params=pltpu.CompilerParams(
                    dimension_semantics=("parallel",),           # independent row tiles
                    vmem_limit_bytes=vmem_limit,
                ),
                cost_estimate=cost,
            )

        try:
            # Single-buffer the grid-invariant weights (halves their VMEM footprint; v7x).
            out2 = build(True)(x2, w1b, b1f, w2b, b2f)
        except Exception:
            # Fallback for jax versions without BlockSpec pipeline_mode / Buffered(1).
            out2 = build(False)(x2, w1b, b1f, w2b, b2f)

        return out2.reshape(lead + (D,))

    return apply


# ------------------------- pure-JAX reference (for checking) -----------------
def reference_forward(x, w1, b1, w2, b2):
    h = x @ w1 + b1
    h = 0.5 * h * (1.0 + jax.lax.erf(h / jnp.sqrt(2.0).astype(h.dtype)))  # exact erf GELU
    return h @ w2 + b2


if __name__ == "__main__":
    # Small shapes consistent with the module: (B, N, dim) tokens, hidden_dim = 2*dim.
    B, N, dim, hidden_dim = 2, 8, 32, 64

    key = jax.random.PRNGKey(0)
    key, kx, k1, k2, k3, k4 = jax.random.split(key, 6)
    x = jax.random.normal(kx, (B, N, dim), dtype=jnp.float32)

    # Effective (ticket-masked) dense weights; PyTorch-Linear-like init scale.
    w1 = (jax.random.normal(k1, (dim, hidden_dim)) / jnp.sqrt(dim)).astype(jnp.float32)
    b1 = (0.1 * jax.random.normal(k2, (hidden_dim,))).astype(jnp.float32)
    w2 = (jax.random.normal(k3, (hidden_dim, dim)) / jnp.sqrt(hidden_dim)).astype(jnp.float32)
    b2 = (0.1 * jax.random.normal(k4, (dim,))).astype(jnp.float32)

    ffn = make_feedforward(w1, b1, w2, b2)     # params cast/reshaped ONCE here
    out = jax.block_until_ready(ffn(x))

    ref = reference_forward(x, w1, b1, w2, b2)
    assert out.shape == (B, N, dim)
    assert out.dtype == jnp.bfloat16
    err = jnp.max(jnp.abs(out.astype(jnp.float32) - ref))
    # bf16 matmul operands + bf16 output + tanh GELU approximation -> relaxed tolerance
    assert err < 5e-2, f"max abs err {err}"

    print("KERNEL_OK")
</pallas_src>

<mosaic_0001>
module attributes {stable_mosaic.version = 11 : i64} {
  func.func @_ffn_kernel(%arg0: i32, %arg1: memref<16x32xf32, #tpu.memory_space<vmem>>, %arg2: memref<32x64xbf16, #tpu.memory_space<vmem>>, %arg3: memref<1x64xf32, #tpu.memory_space<vmem>>, %arg4: memref<64x32xbf16, #tpu.memory_space<vmem>>, %arg5: memref<1x32xf32, #tpu.memory_space<vmem>>, %arg6: memref<16x32xbf16, #tpu.memory_space<vmem>>) attributes {dimension_semantics = [#tpu.dimension_semantics<parallel>], iteration_bounds = array<i64: 1>, scalar_prefetch = 0 : i64, scratch_operands = 0 : i64, tpu.core_type = #tpu.core_type<tc>, window_params = [{transform_indices = @transform_0, window_bounds = array<i64: 16, 32>}, {pipeline_mode = #tpu.pipeline_mode<synchronous>, transform_indices = @transform_1, window_bounds = array<i64: 32, 64>}, {pipeline_mode = #tpu.pipeline_mode<synchronous>, transform_indices = @transform_2, window_bounds = array<i64: 1, 64>}, {pipeline_mode = #tpu.pipeline_mode<synchronous>, transform_indices = @transform_3, window_bounds = array<i64: 64, 32>}, {pipeline_mode = #tpu.pipeline_mode<synchronous>, transform_indices = @transform_4, window_bounds = array<i64: 1, 32>}, {transform_indices = @transform_5, window_bounds = array<i64: 16, 32>}]} {
    %c0 = arith.constant 0 : index
    %c0_0 = arith.constant 0 : index
    %0 = vector.load %arg1[%c0, %c0_0] : memref<16x32xf32, #tpu.memory_space<vmem>>, vector<16x32xf32>
    %1 = arith.truncf %0 : vector<16x32xf32> to vector<16x32xbf16>
    %c0_1 = arith.constant 0 : index
    %c0_2 = arith.constant 0 : index
    %2 = vector.load %arg2[%c0_1, %c0_2] : memref<32x64xbf16, #tpu.memory_space<vmem>>, vector<32x64xbf16>
    %cst = arith.constant dense<0.000000e+00> : vector<16x64xf32>
    %3 = tpu.matmul %1, %2, %cst {dimension_numbers = #tpu.dot_dimension_numbers<[1], [0], [0], [1], [0, 0, 1, 1], [], []>} : vector<16x32xbf16>, vector<32x64xbf16>, vector<16x64xf32> -> vector<16x64xf32>
    %c0_3 = arith.constant 0 : index
    %c0_4 = arith.constant 0 : index
    %4 = vector.load %arg3[%c0_3, %c0_4] : memref<1x64xf32, #tpu.memory_space<vmem>>, vector<1x64xf32>
    %5 = vector.broadcast %4 : vector<1x64xf32> to vector<16x64xf32>
    %6 = arith.addf %3, %5 : vector<16x64xf32>
    %cst_5 = arith.constant 5.000000e-01 : f32
    %7 = vector.broadcast %cst_5 : f32 to vector<16x64xf32>
    %8 = arith.mulf %7, %6 : vector<16x64xf32>
    %cst_6 = arith.constant 4.471500e-02 : f32
    %9 = vector.broadcast %cst_6 : f32 to vector<16x64xf32>
    %10 = arith.mulf %9, %6 : vector<16x64xf32>
    %11 = arith.mulf %10, %6 : vector<16x64xf32>
    %12 = arith.mulf %11, %6 : vector<16x64xf32>
    %13 = arith.addf %6, %12 : vector<16x64xf32>
    %cst_7 = arith.constant 0.797884583 : f32
    %14 = vector.broadcast %cst_7 : f32 to vector<16x64xf32>
    %15 = arith.mulf %14, %13 : vector<16x64xf32>
    %16 = math.tanh %15 : vector<16x64xf32>
    %cst_8 = arith.constant 1.000000e+00 : f32
    %17 = vector.broadcast %cst_8 : f32 to vector<16x64xf32>
    %18 = arith.addf %17, %16 : vector<16x64xf32>
    %19 = arith.mulf %8, %18 : vector<16x64xf32>
    %20 = arith.truncf %19 : vector<16x64xf32> to vector<16x64xbf16>
    %c0_9 = arith.constant 0 : index
    %c0_10 = arith.constant 0 : index
    %21 = vector.load %arg4[%c0_9, %c0_10] : memref<64x32xbf16, #tpu.memory_space<vmem>>, vector<64x32xbf16>
    %cst_11 = arith.constant dense<0.000000e+00> : vector<16x32xf32>
    %22 = tpu.matmul %20, %21, %cst_11 {dimension_numbers = #tpu.dot_dimension_numbers<[1], [0], [0], [1], [0, 0, 1, 1], [], []>} : vector<16x64xbf16>, vector<64x32xbf16>, vector<16x32xf32> -> vector<16x32xf32>
    %c0_12 = arith.constant 0 : index
    %c0_13 = arith.constant 0 : index
    %23 = vector.load %arg5[%c0_12, %c0_13] : memref<1x32xf32, #tpu.memory_space<vmem>>, vector<1x32xf32>
    %24 = vector.broadcast %23 : vector<1x32xf32> to vector<16x32xf32>
    %25 = arith.addf %22, %24 : vector<16x32xf32>
    %26 = arith.truncf %25 : vector<16x32xf32> to vector<16x32xbf16>
    %c0_14 = arith.constant 0 : index
    %c0_15 = arith.constant 0 : index
    %27 = vector.load %arg6[%c0_14, %c0_15] : memref<16x32xbf16, #tpu.memory_space<vmem>>, vector<16x32xbf16>
    tpu.vector_store %arg6[%c0_14, %c0_15], %26 {strides = array<i32>} : memref<16x32xbf16, #tpu.memory_space<vmem>>, vector<16x32xbf16>,
    return
  }
  func.func @transform_0(%arg0: i32) -> (i32, i32) {
    %c0_i32 = arith.constant 0 : i32
    %c0_i32_0 = arith.constant 0 : i32
    return %arg0, %c0_i32 : i32, i32
  }
  func.func @transform_1(%arg0: i32) -> (i32, i32) {
    %c0_i32 = arith.constant 0 : i32
    %c0_i32_0 = arith.constant 0 : i32
    %c0_i32_1 = arith.constant 0 : i32
    return %c0_i32, %c0_i32_0 : i32, i32
  }
  func.func @transform_2(%arg0: i32) -> (i32, i32) {
    %c0_i32 = arith.constant 0 : i32
    %c0_i32_0 = arith.constant 0 : i32
    %c0_i32_1 = arith.constant 0 : i32
    return %c0_i32, %c0_i32_0 : i32, i32
  }
  func.func @transform_3(%arg0: i32) -> (i32, i32) {
    %c0_i32 = arith.constant 0 : i32
    %c0_i32_0 = arith.constant 0 : i32
    %c0_i32_1 = arith.constant 0 : i32
    return %c0_i32, %c0_i32_0 : i32, i32
  }
  func.func @transform_4(%arg0: i32) -> (i32, i32) {
    %c0_i32 = arith.constant 0 : i32
    %c0_i32_0 = arith.constant 0 : i32
    %c0_i32_1 = arith.constant 0 : i32
    return %c0_i32, %c0_i32_0 : i32, i32
  }
  func.func @transform_5(%arg0: i32) -> (i32, i32) {
    %c0_i32 = arith.constant 0 : i32
    %c0_i32_0 = arith.constant 0 : i32
    return %arg0, %c0_i32 : i32, i32
  }
}

module attributes {stable_mosaic.version = 11 : i64} {
  func.func @_ffn_kernel(%arg0: i32, %arg1: memref<16x32xf32, #tpu.memory_space<vmem>>, %arg2: memref<32x64xbf16, #tpu.memory_space<vmem>>, %arg3: memref<1x64xf32, #tpu.memory_space<vmem>>, %arg4: memref<64x32xbf16, #tpu.memory_space<vmem>>, %arg5: memref<1x32xf32, #tpu.memory_space<vmem>>, %arg6: memref<16x32xbf16, #tpu.memory_space<vmem>>) attributes {dimension_semantics = [#tpu.dimension_semantics<parallel>], iteration_bounds = array<i64: 1>, scalar_prefetch = 0 : i64, scratch_operands = 0 : i64, tpu.core_type = #tpu.core_type<tc>, window_params = [{transform_indices = @transform_0, window_bounds = array<i64: 16, 32>}, {pipeline_mode = #tpu.pipeline_mode<synchronous>, transform_indices = @transform_1, window_bounds = array<i64: 32, 64>}, {pipeline_mode = #tpu.pipeline_mode<synchronous>, transform_indices = @transform_2, window_bounds = array<i64: 1, 64>}, {pipeline_mode = #tpu.pipeline_mode<synchronous>, transform_indices = @transform_3, window_bounds = array<i64: 64, 32>}, {pipeline_mode = #tpu.pipeline_mode<synchronous>, transform_indices = @transform_4, window_bounds = array<i64: 1, 32>}, {transform_indices = @transform_5, window_bounds = array<i64: 16, 32>}]} {
    %c0 = arith.constant 0 : index
    %c0_0 = arith.constant 0 : index
    %0 = vector.load %arg1[%c0, %c0_0] : memref<16x32xf32, #tpu.memory_space<vmem>>, vector<16x32xf32>
    %1 = arith.truncf %0 : vector<16x32xf32> to vector<16x32xbf16>
    %c0_1 = arith.constant 0 : index
    %c0_2 = arith.constant 0 : index
    %2 = vector.load %arg2[%c0_1, %c0_2] : memref<32x64xbf16, #tpu.memory_space<vmem>>, vector<32x64xbf16>
    %cst = arith.constant dense<0.000000e+00> : vector<16x64xf32>
    %3 = tpu.matmul %1, %2, %cst {dimension_numbers = #tpu.dot_dimension_numbers<[1], [0], [0], [1], [0, 0, 1, 1], [], []>} : vector<16x32xbf16>, vector<32x64xbf16>, vector<16x64xf32> -> vector<16x64xf32>
    %c0_3 = arith.constant 0 : index
    %c0_4 = arith.constant 0 : index
    %4 = vector.load %arg3[%c0_3, %c0_4] : memref<1x64xf32, #tpu.memory_space<vmem>>, vector<1x64xf32>
    %5 = vector.broadcast %4 : vector<1x64xf32> to vector<16x64xf32>
    %6 = arith.addf %3, %5 : vector<16x64xf32>
    %cst_5 = arith.constant 5.000000e-01 : f32
    %7 = vector.broadcast %cst_5 : f32 to vector<16x64xf32>
    %8 = arith.mulf %7, %6 : vector<16x64xf32>
    %cst_6 = arith.constant 4.471500e-02 : f32
    %9 = vector.broadcast %cst_6 : f32 to vector<16x64xf32>
    %10 = arith.mulf %9, %6 : vector<16x64xf32>
    %11 = arith.mulf %10, %6 : vector<16x64xf32>
    %12 = arith.mulf %11, %6 : vector<16x64xf32>
    %13 = arith.addf %6, %12 : vector<16x64xf32>
    %cst_7 = arith.constant 0.797884583 : f32
    %14 = vector.broadcast %cst_7 : f32 to vector<16x64xf32>
    %15 = arith.mulf %14, %13 : vector<16x64xf32>
    %16 = math.tanh %15 : vector<16x64xf32>
    %cst_8 = arith.constant 1.000000e+00 : f32
    %17 = vector.broadcast %cst_8 : f32 to vector<16x64xf32>
    %18 = arith.addf %17, %16 : vector<16x64xf32>
    %19 = arith.mulf %8, %18 : vector<16x64xf32>
    %20 = arith.truncf %19 : vector<16x64xf32> to vector<16x64xbf16>
    %c0_9 = arith.constant 0 : index
    %c0_10 = arith.constant 0 : index
    %21 = vector.load %arg4[%c0_9, %c0_10] : memref<64x32xbf16, #tpu.memory_space<vmem>>, vector<64x32xbf16>
    %cst_11 = arith.constant dense<0.000000e+00> : vector<16x32xf32>
    %22 = tpu.matmul %20, %21, %cst_11 {dimension_numbers = #tpu.dot_dimension_numbers<[1], [0], [0], [1], [0, 0, 1, 1], [], []>} : vector<16x64xbf16>, vector<64x32xbf16>, vector<16x32xf32> -> vector<16x32xf32>
    %c0_12 = arith.constant 0 : index
    %c0_13 = arith.constant 0 : index
    %23 = vector.load %arg5[%c0_12, %c0_13] : memref<1x32xf32, #tpu.memory_space<vmem>>, vector<1x32xf32>
    %24 = vector.broadcast %23 : vector<1x32xf32> to vector<16x32xf32>
    %25 = arith.addf %22, %24 : vector<16x32xf32>
    %26 = arith.truncf %25 : vector<16x32xf32> to vector<16x32xbf16>
    %c0_14 = arith.constant 0 : index
    %c0_15 = arith.constant 0 : index
    %27 = vector.load %arg6[%c0_14, %c0_15] : memref<16x32xbf16, #tpu.memory_space<vmem>>, vector<16x32xbf16>
    tpu.vector_store %arg6[%c0_14, %c0_15], %26 {strides = array<i32>} : memref<16x32xbf16, #tpu.memory_space<vmem>>, vector<16x32xbf16>,
    return
  }
  func.func @transform_0(%arg0: i32) -> (i32, i32) {
    %c0_i32 = arith.constant 0 : i32
    %c0_i32_0 = arith.constant 0 : i32
    return %arg0, %c0_i32 : i32, i32
  }
  func.func @transform_1(%arg0: i32) -> (i32, i32) {
    %c0_i32 = arith.constant 0 : i32
    %c0_i32_0 = arith.constant 0 : i32
    %c0_i32_1 = arith.constant 0 : i32
    return %c0_i32, %c0_i32_0 : i32, i32
  }
  func.func @transform_2(%arg0: i32) -> (i32, i32) {
    %c0_i32 = arith.constant 0 : i32
    %c0_i32_0 = arith.constant 0 : i32
    %c0_i32_1 = arith.constant 0 : i32
    return %c0_i32, %c0_i32_0 : i32, i32
  }
  func.func @transform_3(%arg0: i32) -> (i32, i32) {
    %c0_i32 = arith.constant 0 : i32
    %c0_i32_0 = arith.constant 0 : i32
    %c0_i32_1 = arith.constant 0 : i32
    return %c0_i32, %c0_i32_0 : i32, i32
  }
  func.func @transform_4(%arg0: i32) -> (i32, i32) {
    %c0_i32 = arith.constant 0 : i32
    %c0_i32_0 = arith.constant 0 : i32
    %c0_i32_1 = arith.constant 0 : i32
    return %c0_i32, %c0_i32_0 : i32, i32
  }
  func.func @transform_5(%arg0: i32) -> (i32, i32) {
    %c0_i32 = arith.constant 0 : i32
    %c0_i32_0 = arith.constant 0 : i32
    return %arg0, %c0_i32 : i32, i32
  }
}

</mosaic_0001>

<llo_original>
// kernel: tpu_custom_call.1
$region0: #{tpu_custom_call.1}
  #allocation0 [shape = 'u32[]', space=smem, size = 0x4, offset = 0x4, fixed_abs, tag = 'smem constant byte address 0x4 - core index']
  #allocation1 [shape = 'u32[144,128]{1,0:T(1,128)}', space=vmem, size = 0x12000, scoped, tag = 'internal scratch']
  %s0 = inlined_call_operand.vmem [shape: f32[16,32], index: 0, kind: input, shape index: {}]
  %s1 = inlined_call_operand.vmem [shape: bf16[32,64], index: 1, kind: input, shape index: {}]
  %s2 = inlined_call_operand.vmem [shape: f32[1,64], index: 2, kind: input, shape index: {}]
  %s3 = inlined_call_operand.vmem [shape: bf16[64,32], index: 3, kind: input, shape index: {}]
  %s4 = inlined_call_operand.vmem [shape: f32[1,32], index: 4, kind: input, shape index: {}]
  %s5 = inlined_call_operand.hbm [shape: bf16[16,32], index: 5, kind: output, shape index: {}]
  %s6 = sld [smem:[#allocation0]]
  $region30: #{tpu_custom_call.1} parent=0
    _
  %s8 = ssub.s32 1, %s6
  %s9 = scalar_select 0, %s8, %s6
  $region1: #{tpu_custom_call.1} parent=0
    #allocation2 [shape = 'u8[4096]{0}', space=vmem, size = 0x1000, scoped, tag = 'output window, operand 0, single buffered']
    #allocation3 [shape = 's32[1]{0}', space=sflag, size = 0x4, scoped, tag = 'scoped memory for tpu_custom_call.1']
    %10 = vsyncpa [#allocation3], 0
    // Predicated region
    $region2: #{tpu_custom_call.1} parent=1 // pred_check
      _
    $region3: #{tpu_custom_call.1} parent=1 // pred_check_branch
      %12 = sbr.rel (0) target = $region5
    $region4: #{tpu_custom_call.1} parent=1 // pred_region
      _
    $region5: #{tpu_custom_call.1} parent=1 // pred_fallthru
      _
    // Predicated region
    $region6: #{tpu_custom_call.1} parent=1 // pred_check
      _
    $region7: #{tpu_custom_call.1} parent=1 // pred_check_branch
      %14 = sbr.rel (0) target = $region9
    $region8: #{tpu_custom_call.1} parent=1 // pred_region
      _
    $region9: #{tpu_custom_call.1} parent=1 // pred_fallthru
      _
    // Predicated region
    $region10: #{tpu_custom_call.1} parent=1 // pred_check
      _
    $region11: #{tpu_custom_call.1} parent=1 // pred_check_branch
      %16 = sbr.rel (0) target = $region13
    $region12: #{tpu_custom_call.1} parent=1 // pred_region
      _
    $region13: #{tpu_custom_call.1} parent=1 // pred_fallthru
      _
    // Predicated region
    $region14: #{tpu_custom_call.1} parent=1 // pred_check
      _
    $region15: #{tpu_custom_call.1} parent=1 // pred_check_branch
      %18 = sbr.rel (0) target = $region17
    $region16: #{tpu_custom_call.1} parent=1 // pred_region
      _
    $region17: #{tpu_custom_call.1} parent=1 // pred_fallthru
      _
    // Predicated region
    $region18: #{tpu_custom_call.1} parent=1 // pred_check
      _
    $region19: #{tpu_custom_call.1} parent=1 // pred_check_branch
      %20 = sbr.rel (0) target = $region21
    $region20: #{tpu_custom_call.1} parent=1 // pred_region
      _
    $region21: #{tpu_custom_call.1} parent=1 // pred_fallthru
      _
    %v22 = vld [vmem:[%s0] sm:$0xff]
    %v23 = vld [vmem:[%s0 + $0x8] sm:$0xff]
    %v24 = vpack.c.bf16 %v23, %v22
    %v25 = vld [vmem:[%s1] sm:$0xf]
    %v26 = vld [vmem:[%s1 + $0x4] sm:$0xf]
    %v27 = vld [vmem:[%s1 + $0x8] sm:$0xf]
    %v28 = vld [vmem:[%s1 + $0xc] sm:$0xf]
    %v29 = vld [vmem:[%s2] sm:$0x1]
    %v31 = vlaneseq
    %v32 = vshrl.u32 %v31, 7
    %v33 = vsub.s32 0, %v32
    %v34 = vrot.slane %v29, %v33
    %v40 = vunpack.c.l.b16 %v25
    %v41 = vunpack.c.l.b16 %v26
    %v42 = vunpack.c.l.b16 %v27
    %v43 = vunpack.c.l.b16 %v28
    %v44 = vpack.c.b16 %v41, %v40
    %v45 = vpack.c.b16 %v43, %v42
    %vm48 = vcmask 261120
    %v50 = vsel %vm48, %v24, 0
    %52 = vmatprep.subr.bf16.mxu0 0
    %53 = vmatpush1.bf16.msra.mxu0 %v44
    %54 = vmatprep.subr.bf16.mxu0 0
    %55 = vmatpush1.bf16.msra.mxu0 %v45
    %56 = vmatprep.subr.bf16.mxu0 0
    %57 = vmatpush1.bf16.msra.mxu0 0
    %58 = vmatprep.subr.bf16.mxu0 0
    %59 = vmatpush1.bf16.msra.mxu0 0
    %60 = vmatprep.subr.bf16.mxu0 0
    %61 = vmatpush1.bf16.msra.mxu0 0
    %62 = vmatprep.subr.bf16.mxu0 0
    %63 = vmatpush1.bf16.msra.mxu0 0
    %64 = vmatprep.subr.bf16.mxu0 0
    %65 = vmatpush1.bf16.msra.mxu0 0
    %66 = vmatprep.subr.bf16.mxu0 0
    %67 = vmatpush1.bf16.msra.mxu0 0
    %68 = vmatprep.subr.bf16.mxu0 0
    %69 = vmatpush1.bf16.msra.mxu0 0
    %70 = vmatprep.subr.bf16.mxu0 0
    %71 = vmatpush1.bf16.msra.mxu0 0
    %72 = vmatprep.subr.bf16.mxu0 0
    %73 = vmatpush1.bf16.msra.mxu0 0
    %74 = vmatprep.subr.bf16.mxu0 0
    %75 = vmatpush1.bf16.msra.mxu0 0
    %76 = vmatprep.subr.bf16.mxu0 0
    %77 = vmatpush1.bf16.msra.mxu0 0
    %78 = vmatprep.subr.bf16.mxu0 0
    %79 = vmatpush1.bf16.msra.mxu0 0
    %80 = vmatprep.subr.bf16.mxu0 0
    %81 = vmatpush1.bf16.msra.mxu0 0
    %82 = vmatprep.subr.bf16.mxu0 0
    %83 = vmatpush1.bf16.msra.mxu0 0
    %84 = vmatprep.mubr.bf16.mxu0 0
    %85 = vmatmul.mubr.bf16.gmra.mrb[0].mxu0 %v50
    %v86 = vpop.f32.mrb[0].mxu0
    %v87 = vadd.f32 %v34, %v86
    %v88 = vpop.f32.mrb[0].mxu0
    %v89 = vpop.f32.mrb[0].mxu0
    %v90 = vadd.f32 %v34, %v89
    %v91 = vpop.f32.mrb[0].mxu0
    %92 = vdwg.mxu0
    %v93 = vmul.f32 %v87, 0.5
    %v94 = vmul.f32 %v90, 0.5
    %v95 = vmul.f32 %v87, 0.044715
    %v96 = vmul.f32 %v90, 0.044715
    %v97 = vmul.f32 %v95, %v87
    %v98 = vmul.f32 %v96, %v90
    %v99 = vmul.f32 %v97, %v87
    %v100 = vmul.f32 %v98, %v90
    %v101 = vadd.f32 %v87, %v99
    %v102 = vadd.f32 %v90, %v100
    %v103 = vmul.f32 %v101, 0.7978846
    %v104 = vmul.f32 %v102, 0.7978846
    %v105 = vtanh.pop %v103
    %v106 = vtanh.pop %v104
    %v107 = vadd.f32 %v105, 1.0
    %v108 = vadd.f32 %v106, 1.0
    %v109 = vmul.f32 %v93, %v107
    %v110 = vmul.f32 %v94, %v108
    %v111 = vpack.c.bf16 %v110, %v109
    %v112 = vld [vmem:[%s3] sm:$0xf]
    %v113 = vld [vmem:[%s3 + $0x4] sm:$0xf]
    %v114 = vld [vmem:[%s3 + $0x8] sm:$0xf]
    %v115 = vld [vmem:[%s3 + $0xc] sm:$0xf]
    %v116 = vld [vmem:[%s3 + $0x10] sm:$0xf]
    %v117 = vld [vmem:[%s3 + $0x14] sm:$0xf]
    %v118 = vld [vmem:[%s3 + $0x18] sm:$0xf]
    %v119 = vld [vmem:[%s3 + $0x1c] sm:$0xf]
    %v120 = vld [vmem:[%s4] sm:$0x1]
    %v122 = vlaneseq
    %v123 = vshrl.u32 %v122, 7
    %v124 = vsub.s32 0, %v123
    %v125 = vrot.slane %v120, %v124
    %v135 = vunpack.c.l.b16 %v112
    %v136 = vunpack.c.l.b16 %v113
    %v137 = vunpack.c.l.b16 %v114
    %v138 = vunpack.c.l.b16 %v115
    %v139 = vunpack.c.l.b16 %v116
    %v140 = vunpack.c.l.b16 %v117
    %v141 = vunpack.c.l.b16 %v118
    %v142 = vunpack.c.l.b16 %v119
    %v143 = vpack.c.b16 %v136, %v135
    %v144 = vpack.c.b16 %v138, %v137
    %v145 = vpack.c.b16 %v140, %v139
    %v146 = vpack.c.b16 %v142, %v141
    %vm151 = vcmask 523264
    %v153 = vsel %vm151, %v111, 0
    %155 = vmatprep.subr.bf16.mxu0 0
    %156 = vmatpush1.bf16.msra.mxu0 %v143
    %157 = vmatprep.subr.bf16.mxu0 0
    %158 = vmatpush1.bf16.msra.mxu0 %v144
    %159 = vmatprep.subr.bf16.mxu0 0
    %160 = vmatpush1.bf16.msra.mxu0 %v145
    %161 = vmatprep.subr.bf16.mxu0 0
    %162 = vmatpush1.bf16.msra.mxu0 %v146
    %163 = vmatprep.subr.bf16.mxu0 0
    %164 = vmatpush1.bf16.msra.mxu0 0
    %165 = vmatprep.subr.bf16.mxu0 0
    %166 = vmatpush1.bf16.msra.mxu0 0
    %167 = vmatprep.subr.bf16.mxu0 0
    %168 = vmatpush1.bf16.msra.mxu0 0
    %169 = vmatprep.subr.bf16.mxu0 0
    %170 = vmatpush1.bf16.msra.mxu0 0
    %171 = vmatprep.subr.bf16.mxu0 0
    %172 = vmatpush1.bf16.msra.mxu0 0
    %173 = vmatprep.subr.bf16.mxu0 0
    %174 = vmatpush1.bf16.msra.mxu0 0
    %175 = vmatprep.subr.bf16.mxu0 0
    %176 = vmatpush1.bf16.msra.mxu0 0
    %177 = vmatprep.subr.bf16.mxu0 0
    %178 = vmatpush1.bf16.msra.mxu0 0
    %179 = vmatprep.subr.bf16.mxu0 0
    %180 = vmatpush1.bf16.msra.mxu0 0
    %181 = vmatprep.subr.bf16.mxu0 0
    %182 = vmatpush1.bf16.msra.mxu0 0
    %183 = vmatprep.subr.bf16.mxu0 0
    %184 = vmatpush1.bf16.msra.mxu0 0
    %185 = vmatprep.subr.bf16.mxu0 0
    %186 = vmatpush1.bf16.msra.mxu0 0
    %187 = vmatprep.mubr.bf16.mxu0 0
    %188 = vmatmul.mubr.bf16.gmra.mrb[0].mxu0 %v153
    %v189 = vpop.f32.mrb[0].mxu0
    %v190 = vadd.f32 %v125, %v189
    %v191 = vpop.f32.mrb[0].mxu0
    %v192 = vpop.f32.mrb[0].mxu0
    %v193 = vadd.f32 %v125, %v192
    %v194 = vpop.f32.mrb[0].mxu0
    %195 = vdwg.mxu0
    %v196 = vpack.c.bf16 %v193, %v190
    %v198 = vunpack.c.l.b16 %v196
    %v199 = vunpack.c.h.b16 %v196
    %v200 = vpack.c.b16 %v198, %v198
    %v201 = vpack.c.b16 %v199, %v199
    %vm204 = vcmask 257024
    %205 = vst.msk [vmem:[#allocation2] sm:$0xf] %vm204, %v200
    %206 = vst.msk [vmem:[#allocation2 + $0x4] sm:$0xf] %vm204, %v201
    // Predicated region
    $region22: #{tpu_custom_call.1} parent=1 // pred_check
      _
    $region23: #{tpu_custom_call.1} parent=1 // pred_check_branch
      %208 = sbr.rel (0) target = $region25
    $region24: #{tpu_custom_call.1} parent=1 // pred_region
      %s210 = ssub.s32 128, 128
      %211 = vsyncadd [#allocation3], %s210
      %s212 = sshll.u32 [#allocation2], 4
      %s213 = int_to_ptr.vmem [resolvable:$true] %s212
      %218 = dma.vmem_to_hbm [thread:$0]  %s213, 128, %s5, [#allocation3], 64, 64, 4
    $region25: #{tpu_custom_call.1} parent=1 // pred_fallthru
      _
    // Predicated region
    $region26: #{tpu_custom_call.1} parent=1 // pred_check
      _
    $region27: #{tpu_custom_call.1} parent=1 // pred_check_branch
      %220 = sbr.rel (0) target = $region29
    $region28: #{tpu_custom_call.1} parent=1 // pred_region
      %221 = dma.done [#allocation3], 128
    $region29: #{tpu_custom_call.1} parent=1 // pred_fallthru
      _
    %222 = vsyncpa [#allocation3], 1

// kernel: tpu_custom_call.1
$region0: #{tpu_custom_call.1}
  #allocation0 [shape = 'u32[]', space=smem, size = 0x4, offset = 0x4, fixed_abs, tag = 'smem constant byte address 0x4 - core index']
  #allocation1 [shape = 'u32[144,128]{1,0:T(1,128)}', space=vmem, size = 0x12000, scoped, tag = 'internal scratch']
  %s0 = inlined_call_operand.vmem [shape: f32[16,32], index: 0, kind: input, shape index: {}]
  %s1 = inlined_call_operand.vmem [shape: bf16[32,64], index: 1, kind: input, shape index: {}]
  %s2 = inlined_call_operand.vmem [shape: f32[1,64], index: 2, kind: input, shape index: {}]
  %s3 = inlined_call_operand.vmem [shape: bf16[64,32], index: 3, kind: input, shape index: {}]
  %s4 = inlined_call_operand.vmem [shape: f32[1,32], index: 4, kind: input, shape index: {}]
  %s5 = inlined_call_operand.hbm [shape: bf16[16,32], index: 5, kind: output, shape index: {}]
  %s6 = sld [smem:[#allocation0]]
  $region30: #{tpu_custom_call.1} parent=0
    _
  %s8 = ssub.s32 1, %s6
  %s9 = scalar_select 0, %s8, %s6
  $region1: #{tpu_custom_call.1} parent=0
    #allocation2 [shape = 'u8[4096]{0}', space=vmem, size = 0x1000, scoped, tag = 'output window, operand 0, single buffered']
    #allocation3 [shape = 's32[1]{0}', space=sflag, size = 0x4, scoped, tag = 'scoped memory for tpu_custom_call.1']
    %10 = vsyncpa [#allocation3], 0
    // Predicated region
    $region2: #{tpu_custom_call.1} parent=1 // pred_check
      _
    $region3: #{tpu_custom_call.1} parent=1 // pred_check_branch
      %12 = sbr.rel (0) target = $region5
    $region4: #{tpu_custom_call.1} parent=1 // pred_region
      _
    $region5: #{tpu_custom_call.1} parent=1 // pred_fallthru
      _
    // Predicated region
    $region6: #{tpu_custom_call.1} parent=1 // pred_check
      _
    $region7: #{tpu_custom_call.1} parent=1 // pred_check_branch
      %14 = sbr.rel (0) target = $region9
    $region8: #{tpu_custom_call.1} parent=1 // pred_region
      _
    $region9: #{tpu_custom_call.1} parent=1 // pred_fallthru
      _
    // Predicated region
    $region10: #{tpu_custom_call.1} parent=1 // pred_check
      _
    $region11: #{tpu_custom_call.1} parent=1 // pred_check_branch
      %16 = sbr.rel (0) target = $region13
    $region12: #{tpu_custom_call.1} parent=1 // pred_region
      _
    $region13: #{tpu_custom_call.1} parent=1 // pred_fallthru
      _
    // Predicated region
    $region14: #{tpu_custom_call.1} parent=1 // pred_check
      _
    $region15: #{tpu_custom_call.1} parent=1 // pred_check_branch
      %18 = sbr.rel (0) target = $region17
    $region16: #{tpu_custom_call.1} parent=1 // pred_region
      _
    $region17: #{tpu_custom_call.1} parent=1 // pred_fallthru
      _
    // Predicated region
    $region18: #{tpu_custom_call.1} parent=1 // pred_check
      _
    $region19: #{tpu_custom_call.1} parent=1 // pred_check_branch
      %20 = sbr.rel (0) target = $region21
    $region20: #{tpu_custom_call.1} parent=1 // pred_region
      _
    $region21: #{tpu_custom_call.1} parent=1 // pred_fallthru
      _
    %v22 = vld [vmem:[%s0] sm:$0xff]
    %v23 = vld [vmem:[%s0 + $0x8] sm:$0xff]
    %v24 = vpack.c.bf16 %v23, %v22
    %v25 = vld [vmem:[%s1] sm:$0xf]
    %v26 = vld [vmem:[%s1 + $0x4] sm:$0xf]
    %v27 = vld [vmem:[%s1 + $0x8] sm:$0xf]
    %v28 = vld [vmem:[%s1 + $0xc] sm:$0xf]
    %v29 = vld [vmem:[%s2] sm:$0x1]
    %v31 = vlaneseq
    %v32 = vshrl.u32 %v31, 7
    %v33 = vsub.s32 0, %v32
    %v34 = vrot.slane %v29, %v33
    %v40 = vunpack.c.l.b16 %v25
    %v41 = vunpack.c.l.b16 %v26
    %v42 = vunpack.c.l.b16 %v27
    %v43 = vunpack.c.l.b16 %v28
    %v44 = vpack.c.b16 %v41, %v40
    %v45 = vpack.c.b16 %v43, %v42
    %vm48 = vcmask 261120
    %v50 = vsel %vm48, %v24, 0
    %52 = vmatprep.subr.bf16.mxu0 0
    %53 = vmatpush1.bf16.msra.mxu0 %v44
    %54 = vmatprep.subr.bf16.mxu0 0
    %55 = vmatpush1.bf16.msra.mxu0 %v45
    %56 = vmatprep.subr.bf16.mxu0 0
    %57 = vmatpush1.bf16.msra.mxu0 0
    %58 = vmatprep.subr.bf16.mxu0 0
    %59 = vmatpush1.bf16.msra.mxu0 0
    %60 = vmatprep.subr.bf16.mxu0 0
    %61 = vmatpush1.bf16.msra.mxu0 0
    %62 = vmatprep.subr.bf16.mxu0 0
    %63 = vmatpush1.bf16.msra.mxu0 0
    %64 = vmatprep.subr.bf16.mxu0 0
    %65 = vmatpush1.bf16.msra.mxu0 0
    %66 = vmatprep.subr.bf16.mxu0 0
    %67 = vmatpush1.bf16.msra.mxu0 0
    %68 = vmatprep.subr.bf16.mxu0 0
    %69 = vmatpush1.bf16.msra.mxu0 0
    %70 = vmatprep.subr.bf16.mxu0 0
    %71 = vmatpush1.bf16.msra.mxu0 0
    %72 = vmatprep.subr.bf16.mxu0 0
    %73 = vmatpush1.bf16.msra.mxu0 0
    %74 = vmatprep.subr.bf16.mxu0 0
    %75 = vmatpush1.bf16.msra.mxu0 0
    %76 = vmatprep.subr.bf16.mxu0 0
    %77 = vmatpush1.bf16.msra.mxu0 0
    %78 = vmatprep.subr.bf16.mxu0 0
    %79 = vmatpush1.bf16.msra.mxu0 0
    %80 = vmatprep.subr.bf16.mxu0 0
    %81 = vmatpush1.bf16.msra.mxu0 0
    %82 = vmatprep.subr.bf16.mxu0 0
    %83 = vmatpush1.bf16.msra.mxu0 0
    %84 = vmatprep.mubr.bf16.mxu0 0
    %85 = vmatmul.mubr.bf16.gmra.mrb[0].mxu0 %v50
    %v86 = vpop.f32.mrb[0].mxu0
    %v87 = vadd.f32 %v34, %v86
    %v88 = vpop.f32.mrb[0].mxu0
    %v89 = vpop.f32.mrb[0].mxu0
    %v90 = vadd.f32 %v34, %v89
    %v91 = vpop.f32.mrb[0].mxu0
    %92 = vdwg.mxu0
    %v93 = vmul.f32 %v87, 0.5
    %v94 = vmul.f32 %v90, 0.5
    %v95 = vmul.f32 %v87, 0.044715
    %v96 = vmul.f32 %v90, 0.044715
    %v97 = vmul.f32 %v95, %v87
    %v98 = vmul.f32 %v96, %v90
    %v99 = vmul.f32 %v97, %v87
    %v100 = vmul.f32 %v98, %v90
    %v101 = vadd.f32 %v87, %v99
    %v102 = vadd.f32 %v90, %v100
    %v103 = vmul.f32 %v101, 0.7978846
    %v104 = vmul.f32 %v102, 0.7978846
    %v105 = vtanh.pop %v103
    %v106 = vtanh.pop %v104
    %v107 = vadd.f32 %v105, 1.0
    %v108 = vadd.f32 %v106, 1.0
    %v109 = vmul.f32 %v93, %v107
    %v110 = vmul.f32 %v94, %v108
    %v111 = vpack.c.bf16 %v110, %v109
    %v112 = vld [vmem:[%s3] sm:$0xf]
    %v113 = vld [vmem:[%s3 + $0x4] sm:$0xf]
    %v114 = vld [vmem:[%s3 + $0x8] sm:$0xf]
    %v115 = vld [vmem:[%s3 + $0xc] sm:$0xf]
    %v116 = vld [vmem:[%s3 + $0x10] sm:$0xf]
    %v117 = vld [vmem:[%s3 + $0x14] sm:$0xf]
    %v118 = vld [vmem:[%s3 + $0x18] sm:$0xf]
    %v119 = vld [vmem:[%s3 + $0x1c] sm:$0xf]
    %v120 = vld [vmem:[%s4] sm:$0x1]
    %v122 = vlaneseq
    %v123 = vshrl.u32 %v122, 7
    %v124 = vsub.s32 0, %v123
    %v125 = vrot.slane %v120, %v124
    %v135 = vunpack.c.l.b16 %v112
    %v136 = vunpack.c.l.b16 %v113
    %v137 = vunpack.c.l.b16 %v114
    %v138 = vunpack.c.l.b16 %v115
    %v139 = vunpack.c.l.b16 %v116
    %v140 = vunpack.c.l.b16 %v117
    %v141 = vunpack.c.l.b16 %v118
    %v142 = vunpack.c.l.b16 %v119
    %v143 = vpack.c.b16 %v136, %v135
    %v144 = vpack.c.b16 %v138, %v137
    %v145 = vpack.c.b16 %v140, %v139
    %v146 = vpack.c.b16 %v142, %v141
    %vm151 = vcmask 523264
    %v153 = vsel %vm151, %v111, 0
    %155 = vmatprep.subr.bf16.mxu0 0
    %156 = vmatpush1.bf16.msra.mxu0 %v143
    %157 = vmatprep.subr.bf16.mxu0 0
    %158 = vmatpush1.bf16.msra.mxu0 %v144
    %159 = vmatprep.subr.bf16.mxu0 0
    %160 = vmatpush1.bf16.msra.mxu0 %v145
    %161 = vmatprep.subr.bf16.mxu0 0
    %162 = vmatpush1.bf16.msra.mxu0 %v146
    %163 = vmatprep.subr.bf16.mxu0 0
    %164 = vmatpush1.bf16.msra.mxu0 0
    %165 = vmatprep.subr.bf16.mxu0 0
    %166 = vmatpush1.bf16.msra.mxu0 0
    %167 = vmatprep.subr.bf16.mxu0 0
    %168 = vmatpush1.bf16.msra.mxu0 0
    %169 = vmatprep.subr.bf16.mxu0 0
    %170 = vmatpush1.bf16.msra.mxu0 0
    %171 = vmatprep.subr.bf16.mxu0 0
    %172 = vmatpush1.bf16.msra.mxu0 0
    %173 = vmatprep.subr.bf16.mxu0 0
    %174 = vmatpush1.bf16.msra.mxu0 0
    %175 = vmatprep.subr.bf16.mxu0 0
    %176 = vmatpush1.bf16.msra.mxu0 0
    %177 = vmatprep.subr.bf16.mxu0 0
    %178 = vmatpush1.bf16.msra.mxu0 0
    %179 = vmatprep.subr.bf16.mxu0 0
    %180 = vmatpush1.bf16.msra.mxu0 0
    %181 = vmatprep.subr.bf16.mxu0 0
    %182 = vmatpush1.bf16.msra.mxu0 0
    %183 = vmatprep.subr.bf16.mxu0 0
    %184 = vmatpush1.bf16.msra.mxu0 0
    %185 = vmatprep.subr.bf16.mxu0 0
    %186 = vmatpush1.bf16.msra.mxu0 0
    %187 = vmatprep.mubr.bf16.mxu0 0
    %188 = vmatmul.mubr.bf16.gmra.mrb[0].mxu0 %v153
    %v189 = vpop.f32.mrb[0].mxu0
    %v190 = vadd.f32 %v125, %v189
    %v191 = vpop.f32.mrb[0].mxu0
    %v192 = vpop.f32.mrb[0].mxu0
    %v193 = vadd.f32 %v125, %v192
    %v194 = vpop.f32.mrb[0].mxu0
    %195 = vdwg.mxu0
    %v196 = vpack.c.bf16 %v193, %v190
    %v198 = vunpack.c.l.b16 %v196
    %v199 = vunpack.c.h.b16 %v196
    %v200 = vpack.c.b16 %v198, %v198
    %v201 = vpack.c.b16 %v199, %v199
    %vm204 = vcmask 257024
    %205 = vst.msk [vmem:[#allocation2] sm:$0xf] %vm204, %v200
    %206 = vst.msk [vmem:[#allocation2 + $0x4] sm:$0xf] %vm204, %v201
    // Predicated region
    $region22: #{tpu_custom_call.1} parent=1 // pred_check
      _
    $region23: #{tpu_custom_call.1} parent=1 // pred_check_branch
      %208 = sbr.rel (0) target = $region25
    $region24: #{tpu_custom_call.1} parent=1 // pred_region
      %s210 = ssub.s32 128, 128
      %211 = vsyncadd [#allocation3], %s210
      %s212 = sshll.u32 [#allocation2], 4
      %s213 = int_to_ptr.vmem [resolvable:$true] %s212
      %218 = dma.vmem_to_hbm [thread:$0]  %s213, 128, %s5, [#allocation3], 64, 64, 4
    $region25: #{tpu_custom_call.1} parent=1 // pred_fallthru
      _
    // Predicated region
    $region26: #{tpu_custom_call.1} parent=1 // pred_check
      _
    $region27: #{tpu_custom_call.1} parent=1 // pred_check_branch
      %220 = sbr.rel (0) target = $region29
    $region28: #{tpu_custom_call.1} parent=1 // pred_region
      %221 = dma.done [#allocation3], 128
    $region29: #{tpu_custom_call.1} parent=1 // pred_fallthru
      _
    %222 = vsyncpa [#allocation3], 1

</llo_original>
